<compile_context>
chip_gen: v5e
topology: v5e:2x2
jax: 0.10.0
libtpu: 0.0.40
codegen_flags: <defaults>
</compile_context>

<pallas_src>
import functools

import jax
import jax.numpy as jnp
from jax.experimental import pallas as pl
from jax.experimental.pallas import tpu as pltpu


def _round_up(x, m):
    return ((x + m - 1) // m) * m


def _choose_row_tile(rows_out, rows_in, q_budget=16 * 1024 * 1024):
    """Largest rows_out block (multiple of 8) whose double-buffered bf16 Q slab
    fits `q_budget`; full rows_out if it already fits (or is not 8-aligned)."""
    if rows_out % 8 != 0:
        return rows_out
    lane_in = _round_up(rows_in, 128)
    rt = rows_out
    while rt > 8 and 2 * rt * lane_in * 2 > q_budget:
        rt = max(8, _round_up(rt // 2, 8))
    return rt


def _choose_lane_tile(lanes, rows_in, row_tile, out_bytes,
                      vmem_budget=40 * 1024 * 1024):
    """Largest lane tile in {8192,...,128} whose double-buffered blocks
    (x f32 in, out, resident Q bf16 + bias) fit `vmem_budget` and which wastes
    <= 25% of lanes to the partial tail block."""
    sub_in = _round_up(rows_in, 8)
    sub_out = _round_up(row_tile, 8)
    fixed = 2 * (sub_out * _round_up(rows_in, 128) * 2    # Q block (bf16)
                 + sub_out * 128 * 4)                      # bias block (f32, lane-padded)
    for t in (8192, 4096, 2048, 1024, 512, 256, 128):
        n_blk = -(-lanes // t)
        waste = n_blk * t - lanes
        vmem = fixed + 2 * (sub_in * t * 4 + sub_out * t * out_bytes)
        if vmem <= vmem_budget and 4 * waste <= n_blk * t:
            return t
    return 128


def _gcn_fused_kernel(q_ref, b_ref, x_ref, o_ref):
    # One MXU matmul per (batch, row-tile, lane-tile) grid step:
    #   o[(o,w), t] = sum_{(c,v)} Q[(o,w),(c,v)] * x[(c,v), t] + b[o]
    # x cast to bf16 in VMEM (no separate HBM cast pass), f32 accumulation.
    x_bf = x_ref[...].astype(jnp.bfloat16)
    acc = jnp.dot(q_ref[...], x_bf, preferred_element_type=jnp.float32)
    o_ref[...] = (acc + b_ref[...]).astype(o_ref.dtype)


def _fold_gcn_weights(supports, W, b, c_in, order):
    """Fold adjacency powers and 1x1-conv weights into one operator.

    Returns Q (c_out*V, c_in*V) with Q[(o,w),(c,v)] = sum_k W[o,k*C+c] P_k[v,w]
    (P_0 = I, then A, A^2, ... per support in the module's torch.cat order) and
    the bias column (c_out*V, 1).
    """
    V = supports[0].shape[0]
    powers = [jnp.eye(V, dtype=jnp.float32)]
    for a in supports:
        ap = a.astype(jnp.float32)
        powers.append(ap)
        for _ in range(2, order + 1):
            ap = ap @ a.astype(jnp.float32)
            powers.append(ap)
    P = jnp.stack(powers, axis=0)                          # (K1, V, V): P[k, v, w]
    k1 = len(powers)
    c_out = W.shape[0]
    assert W.shape[1] == k1 * c_in, (W.shape, k1, c_in)
    Wk = W.astype(jnp.float32).reshape(c_out, k1, c_in)    # Wk[o, k, c]
    Q = jnp.einsum('okc,kvw->owcv', Wk, P).reshape(c_out * V, c_in * V)
    b_col = jnp.repeat(b.astype(jnp.float32), V)[:, None]  # (c_out*V, 1)
    return Q, b_col


@functools.partial(jax.jit, static_argnames=("order", "out_dtype"))
def gcn_forward(x, supports, W, b, order=2, out_dtype=jnp.float32):
    """gcn.forward (eval).  x: (N,C,V,L); supports: list of (V,V);
    W: (c_out, (order*len(supports)+1)*C); b: (c_out,).  Returns (N,c_out,V,L)."""
    N, C, V, L = x.shape
    c_out = W.shape[0]
    Q, b_col = _fold_gcn_weights(supports, W, b, C, order)
    q_b = Q.astype(jnp.bfloat16)

    rows_in, rows_out = C * V, c_out * V
    out_bytes = jnp.dtype(out_dtype).itemsize

    # Small-L path: fold batch into the lane axis so lanes stay dense.
    fold_batch = (L < 128) and (N > 1)
    if fold_batch:
        xk = jnp.transpose(x.reshape(N, rows_in, L), (1, 0, 2)).reshape(1, rows_in, N * L)
        B, lanes = 1, N * L
    else:
        xk = x.reshape(N, rows_in, L)                      # free reshape, no data movement
        B, lanes = N, L

    row_tile = _choose_row_tile(rows_out, rows_in)
    tl = _choose_lane_tile(lanes, rows_in, row_tile, out_bytes)
    row_blocks = pl.cdiv(rows_out, row_tile)
    lane_blocks = pl.cdiv(lanes, tl)
    # v7x megacore: avoid a single-step grid when the lane axis can be split.
    while B * row_blocks * lane_blocks < 2 and tl >= 256 and lanes > tl // 2:
        tl //= 2
        lane_blocks = pl.cdiv(lanes, tl)

    grid = (B, row_blocks, lane_blocks)
    out3 = pl.pallas_call(
        _gcn_fused_kernel,
        out_shape=jax.ShapeDtypeStruct((B, rows_out, lanes), out_dtype),
        grid=grid,
        in_specs=[
            # Folded operator + bias: index map depends only on the row-tile axis,
            # so for small Q they stay VMEM-resident across the whole lane sweep.
            pl.BlockSpec((row_tile, rows_in), lambda n, r, i: (r, 0)),
            pl.BlockSpec((row_tile, 1), lambda n, r, i: (r, 0)),
            # x tile: (C*V, tl) slab per (batch, lane-tile); partial tail block is
            # handled by Pallas masking (no HBM pad pass).
            pl.BlockSpec((None, rows_in, tl), lambda n, r, i: (n, 0, i)),
        ],
        out_specs=pl.BlockSpec((None, row_tile, tl), lambda n, r, i: (n, r, i)),
        compiler_params=pltpu.CompilerParams(
            dimension_semantics=("parallel", "parallel", "parallel"),
            vmem_limit_bytes=48 * 1024 * 1024),
    )(q_b, b_col, xk)

    if fold_batch:
        out = jnp.transpose(out3.reshape(rows_out, N, L), (1, 0, 2)).reshape(N, c_out, V, L)
    else:
        out = out3.reshape(N, c_out, V, L)                 # free reshape back
    # F.dropout with training=False is the identity: no-op.
    return out


def gcn_ref(x, supports, W, b, order=2):
    """Pure-JAX f32 reference mirroring the PyTorch module exactly."""
    out = [x]
    for a in supports:
        x1 = jnp.einsum('ncvl,vw->ncwl', x, a)
        out.append(x1)
        for _ in range(2, order + 1):
            x2 = jnp.einsum('ncvl,vw->ncwl', x1, a)
            out.append(x2)
            x1 = x2
    h = jnp.concatenate(out, axis=1)
    return jnp.einsum('oc,ncvl->novl', W, h) + b[None, :, None, None]


if __name__ == "__main__":
    key = jax.random.PRNGKey(0)
    N, C_in, V, L = 2, 4, 16, 512
    c_out, support_len, order = 8, 2, 2
    c_tot = (order * support_len + 1) * C_in               # (2*2+1)*4 = 20

    k1, k2, k3, k4, k5, k6, k7 = jax.random.split(key, 7)
    x = jax.random.normal(k1, (N, C_in, V, L), dtype=jnp.float32)
    a1 = jax.random.uniform(k2, (V, V), dtype=jnp.float32)
    a1 = a1 / a1.sum(axis=1, keepdims=True)                 # row-normalized adjacency
    a2 = jax.random.uniform(k3, (V, V), dtype=jnp.float32)
    a2 = a2 / a2.sum(axis=1, keepdims=True)
    supports = [a1, a2]

    # Conv2d(c_tot, c_out, kernel_size=(1,1), bias=True) params, squeezed to 2-D.
    W = 0.1 * jax.random.normal(k4, (c_out, c_tot), dtype=jnp.float32)
    b = 0.1 * jax.random.normal(k5, (c_out,), dtype=jnp.float32)

    # Case 1: lane axis a clean multiple of the tile.
    out = jax.block_until_ready(gcn_forward(x, supports, W, b, order=order))
    ref = gcn_ref(x, supports, W, b, order=order)
    assert out.shape == (N, c_out, V, L), out.shape
    assert jnp.allclose(out, ref, atol=3e-2, rtol=3e-2), \
        float(jnp.max(jnp.abs(out - ref)))

    # Case 2: ragged time axis (partial tail lane block, no pad/slice HBM passes).
    L2 = 200
    x_b = jax.random.normal(k6, (N, C_in, V, L2), dtype=jnp.float32)
    out_b = jax.block_until_ready(gcn_forward(x_b, supports, W, b, order=order))
    ref_b = gcn_ref(x_b, supports, W, b, order=order)
    assert out_b.shape == (N, c_out, V, L2), out_b.shape
    assert jnp.allclose(out_b, ref_b, atol=3e-2, rtol=3e-2), \
        float(jnp.max(jnp.abs(out_b - ref_b)))

    # Case 3: small L (traffic-model-like) -> batch folded into the lane axis.
    N3, L3 = 8, 12
    x_c = jax.random.normal(k7, (N3, C_in, V, L3), dtype=jnp.float32)
    out_c = jax.block_until_ready(gcn_forward(x_c, supports, W, b, order=order))
    ref_c = gcn_ref(x_c, supports, W, b, order=order)
    assert out_c.shape == (N3, c_out, V, L3), out_c.shape
    assert jnp.allclose(out_c, ref_c, atol=3e-2, rtol=3e-2), \
        float(jnp.max(jnp.abs(out_c - ref_c)))

    print("KERNEL_OK")
</pallas_src>

<mosaic_0001>
module attributes {stable_mosaic.version = 11 : i64} {
  func.func @_gcn_fused_kernel(%arg0: i32, %arg1: i32, %arg2: i32, %arg3: memref<128x64xbf16, #tpu.memory_space<vmem>>, %arg4: memref<128x1xf32, #tpu.memory_space<vmem>>, %arg5: memref<1x64x512xf32, #tpu.memory_space<vmem>>, %arg6: memref<1x128x512xf32, #tpu.memory_space<vmem>>) attributes {dimension_semantics = [#tpu.dimension_semantics<parallel>, #tpu.dimension_semantics<parallel>, #tpu.dimension_semantics<parallel>], iteration_bounds = array<i64: 2, 1, 1>, scalar_prefetch = 0 : i64, scratch_operands = 0 : i64, tpu.core_type = #tpu.core_type<tc>, window_params = [{transform_indices = @transform_0, window_bounds = array<i64: 128, 64>}, {transform_indices = @transform_1, window_bounds = array<i64: 128, 1>}, {transform_indices = @transform_2, window_bounds = array<i64: 1, 64, 512>}, {transform_indices = @transform_3, window_bounds = array<i64: 1, 128, 512>}]} {
    %c0 = arith.constant 0 : index
    %c0_0 = arith.constant 0 : index
    %c0_1 = arith.constant 0 : index
    %0 = vector.load %arg5[%c0, %c0_0, %c0_1] : memref<1x64x512xf32, #tpu.memory_space<vmem>>, vector<1x64x512xf32>
    %1 = vector.shape_cast %0 : vector<1x64x512xf32> to vector<64x512xf32>
    %2 = arith.truncf %1 : vector<64x512xf32> to vector<64x512xbf16>
    %c0_2 = arith.constant 0 : index
    %c0_3 = arith.constant 0 : index
    %3 = vector.load %arg3[%c0_2, %c0_3] : memref<128x64xbf16, #tpu.memory_space<vmem>>, vector<128x64xbf16>
    %cst = arith.constant dense<0.000000e+00> : vector<128x512xf32>
    %4 = tpu.matmul %3, %2, %cst {dimension_numbers = #tpu.dot_dimension_numbers<[1], [0], [0], [1], [0, 0, 1, 1], [], []>} : vector<128x64xbf16>, vector<64x512xbf16>, vector<128x512xf32> -> vector<128x512xf32>
    %c0_4 = arith.constant 0 : index
    %c0_5 = arith.constant 0 : index
    %5 = vector.load %arg4[%c0_4, %c0_5] : memref<128x1xf32, #tpu.memory_space<vmem>>, vector<128x1xf32>
    %6 = vector.broadcast %5 : vector<128x1xf32> to vector<128x512xf32>
    %7 = arith.addf %4, %6 : vector<128x512xf32>
    %c0_6 = arith.constant 0 : index
    %c0_7 = arith.constant 0 : index
    %c0_8 = arith.constant 0 : index
    %8 = vector.load %arg6[%c0_6, %c0_7, %c0_8] : memref<1x128x512xf32, #tpu.memory_space<vmem>>, vector<1x128x512xf32>
    %9 = vector.shape_cast %8 : vector<1x128x512xf32> to vector<128x512xf32>
    %10 = vector.shape_cast %7 : vector<128x512xf32> to vector<1x128x512xf32>
    tpu.vector_store %arg6[%c0_6, %c0_7, %c0_8], %10 {strides = array<i32>} : memref<1x128x512xf32, #tpu.memory_space<vmem>>, vector<1x128x512xf32>,
    return
  }
  func.func @transform_0(%arg0: i32, %arg1: i32, %arg2: i32) -> (i32, i32) {
    %c0_i32 = arith.constant 0 : i32
    %c0_i32_0 = arith.constant 0 : i32
    return %arg1, %c0_i32 : i32, i32
  }
  func.func @transform_1(%arg0: i32, %arg1: i32, %arg2: i32) -> (i32, i32) {
    %c0_i32 = arith.constant 0 : i32
    %c0_i32_0 = arith.constant 0 : i32
    return %arg1, %c0_i32 : i32, i32
  }
  func.func @transform_2(%arg0: i32, %arg1: i32, %arg2: i32) -> (i32, i32, i32) {
    %c0_i32 = arith.constant 0 : i32
    %c0_i32_0 = arith.constant 0 : i32
    return %arg0, %c0_i32, %arg2 : i32, i32, i32
  }
  func.func @transform_3(%arg0: i32, %arg1: i32, %arg2: i32) -> (i32, i32, i32) {
    %c0_i32 = arith.constant 0 : i32
    return %arg0, %arg1, %arg2 : i32, i32, i32
  }
}

</mosaic_0001>

<llo_original>
// kernel: gcn_forward.1
$region0: #{gcn_forward.1}
  #allocation0 [shape = 'u32[]', space=smem, size = 0x4, offset = 0x4, fixed_abs, tag = 'smem constant byte address 0x4 - core index']
  #allocation1 [shape = 'u32[72,128]{1,0:T(1,128)}', space=vmem, size = 0x9000, scoped, tag = 'internal scratch']
  %s0 = inlined_call_operand.vmem [shape: bf16[128,64], index: 0, kind: input, shape index: {}]
  %s1 = inlined_call_operand.vmem [shape: f32[128,1], index: 1, kind: input, shape index: {}]
  %s2 = inlined_call_operand.vmem [shape: f32[2,64,512], index: 2, kind: input, shape index: {}]
  %s3 = inlined_call_operand.hbm [shape: f32[2,128,512], index: 3, kind: output, shape index: {}]
  %s4 = sld [smem:[#allocation0]]
  $region45: #{gcn_forward.1} parent=0
    _
  %s6 = ssub.s32 1, %s4
  %s7 = scalar_select 0, %s6, %s4
  $region1: #{gcn_forward.1} parent=0
    #allocation2 [shape = 'u8[524288]{0}', space=vmem, size = 0x80000, scoped, tag = 'output window, operand 0']
    #allocation3 [shape = 's32[2]{0}', space=sflag, size = 0x8, scoped, tag = 'scoped memory for gcn_forward.1']
    %8 = vsyncpa [#allocation3], 0
    %s9 = scalar_lea.sflag [#allocation3], 1
    %10 = vsyncpa %s9, 0
    loop: start=0, step=1, limit=4
    $region2: #{gcn_forward.1} parent=1 // loop_pre_header
      _
    $region3: #{gcn_forward.1} parent=1 // loop_header
      %s12 = sphi 0, %s16
      %p13 = scmp.ge.s32.totalorder %s12, 4
      %s19 = sphi 0, %s38
      %s20 = sphi 0, %s34
      %s21 = sphi 0, %s30
      %s22 = sphi 0, %s19
      %s23 = sphi 0, %s20
      %s24 = sphi 0, %s21
      %s25 = sphi 0, %s22
      %s26 = sphi 0, %s23
      %s27 = sphi 0, %s24
      %s41 = sphi 0, %s43
      %s44 = sphi 0, %s41
      %s45 = sphi 0, %s44
      %s61 = sphi 0, %s45
      %s67 = sphi 0, %s69
      %s70 = sphi 0, %s67
      %s71 = sphi 0, %s70
      %s87 = sphi 0, %s71
      %s95 = sphi 0, %s97
      %s98 = sphi 0, %s95
      %s99 = sphi 0, %s98
      %s115 = sphi 0, %s99
      %s125 = sphi 0, %s127
      %s128 = sphi 0, %s125
      %s129 = sphi 0, %s128
      %s145 = sphi 0, %s129
    $region4: #{gcn_forward.1} parent=1 // loop_header_branch
      %15 = sbr.rel (%p13) target = $region8
    $region5: #{gcn_forward.1} parent=1 // loop_body
      %s17 = ssub.s32 %s12, 1
      %s18 = ssub.s32 %s12, 2
      %s28 = sadd.s32 1, %s21
      %p29 = scmp.ge.s32.totalorder %s28, 1
      %s30 = scalar_select %p29, 0, %s28
      %s31 = sadd.s32 1, %s20
      %s32 = scalar_select %p29, %s31, %s20
      %p33 = scmp.ge.s32.totalorder %s32, 1
      %s34 = scalar_select %p33, 0, %s32
      %s35 = sadd.s32 1, %s19
      %s36 = scalar_select %p33, %s35, %s19
      %p37 = scmp.ge.s32.totalorder %s36, 2
      %s38 = scalar_select %p37, 0, %s36
      %s39 = ssub.s32 %s20, %s34
      %p40 = scmp.eq.s32.totalorder %s39, 0
      %s42 = sadd.s32 %s41, 1
      %s43 = scalar_select %p40, %s41, %s42
      %p46 = pneg %p40
      %p47 = scmp.eq.s32.totalorder %s12, 1
      %p48 = por %p46, %p47
      %p49 = scmp.ne.s32.totalorder %s41, %s44
      %p50 = scmp.eq.s32.totalorder %s12, 0
      %p51 = por %p49, %p50
      %p52 = scmp.ne.s32.totalorder %s41, %s44
      %p53 = scmp.eq.s32.totalorder %s17, 1
      %p54 = por %p52, %p53
      %p55 = scmp.ne.s32.totalorder %s44, %s45
      %p56 = scmp.eq.s32.totalorder %s17, 0
      %p57 = por %p55, %p56
      %p58 = scmp.ne.s32.totalorder %s44, %s45
      %p59 = scmp.eq.s32.totalorder %s18, 1
      %p60 = por %p58, %p59
      %p62 = scmp.ne.s32.totalorder %s45, %s61
      %p63 = scmp.eq.s32.totalorder %s18, 0
      %p64 = por %p62, %p63
      %s65 = ssub.s32 %s20, %s34
      %p66 = scmp.eq.s32.totalorder %s65, 0
      %s68 = sadd.s32 %s67, 1
      %s69 = scalar_select %p66, %s67, %s68
      %p72 = pneg %p66
      %p73 = scmp.eq.s32.totalorder %s12, 1
      %p74 = por %p72, %p73
      %p75 = scmp.ne.s32.totalorder %s67, %s70
      %p76 = scmp.eq.s32.totalorder %s12, 0
      %p77 = por %p75, %p76
      %p78 = scmp.ne.s32.totalorder %s67, %s70
      %p79 = scmp.eq.s32.totalorder %s17, 1
      %p80 = por %p78, %p79
      %p81 = scmp.ne.s32.totalorder %s70, %s71
      %p82 = scmp.eq.s32.totalorder %s17, 0
      %p83 = por %p81, %p82
      %p84 = scmp.ne.s32.totalorder %s70, %s71
      %p85 = scmp.eq.s32.totalorder %s18, 1
      %p86 = por %p84, %p85
      %p88 = scmp.ne.s32.totalorder %s71, %s87
      %p89 = scmp.eq.s32.totalorder %s18, 0
      %p90 = por %p88, %p89
      %s91 = ssub.s32 %s19, %s38
      %s92 = ssub.s32 %s21, %s30
      %s93 = sor.u32 %s91, %s92
      %p94 = scmp.eq.s32.totalorder %s93, 0
      %s96 = sadd.s32 %s95, 1
      %s97 = scalar_select %p94, %s95, %s96
      %p100 = pneg %p94
      %p101 = scmp.eq.s32.totalorder %s12, 1
      %p102 = por %p100, %p101
      %p103 = scmp.ne.s32.totalorder %s95, %s98
      %p104 = scmp.eq.s32.totalorder %s12, 0
      %p105 = por %p103, %p104
      %p106 = scmp.ne.s32.totalorder %s95, %s98
      %p107 = scmp.eq.s32.totalorder %s17, 1
      %p108 = por %p106, %p107
      %p109 = scmp.ne.s32.totalorder %s98, %s99
      %p110 = scmp.eq.s32.totalorder %s17, 0
      %p111 = por %p109, %p110
      %p112 = scmp.ne.s32.totalorder %s98, %s99
      %p113 = scmp.eq.s32.totalorder %s18, 1
      %p114 = por %p112, %p113
      %p116 = scmp.ne.s32.totalorder %s99, %s115
      %p117 = scmp.eq.s32.totalorder %s18, 0
      %p118 = por %p116, %p117
      %s119 = ssub.s32 %s19, %s38
      %s120 = ssub.s32 %s20, %s34
      %s121 = sor.u32 %s119, %s120
      %s122 = ssub.s32 %s21, %s30
      %s123 = sor.u32 %s121, %s122
      %p124 = scmp.eq.s32.totalorder %s123, 0
      %s126 = sadd.s32 %s125, 1
      %s127 = scalar_select %p124, %s125, %s126
      %p130 = pneg %p124
      %p131 = scmp.eq.s32.totalorder %s12, 1
      %p132 = por %p130, %p131
      %p133 = scmp.ne.s32.totalorder %s125, %s128
      %p134 = scmp.eq.s32.totalorder %s12, 0
      %p135 = por %p133, %p134
      %p136 = scmp.ne.s32.totalorder %s125, %s128
      %p137 = scmp.eq.s32.totalorder %s17, 1
      %p138 = por %p136, %p137
      %p139 = scmp.ne.s32.totalorder %s128, %s129
      %p140 = scmp.eq.s32.totalorder %s17, 0
      %p141 = por %p139, %p140
      %p142 = scmp.ne.s32.totalorder %s128, %s129
      %p143 = scmp.eq.s32.totalorder %s18, 1
      %p144 = por %p142, %p143
      %p146 = scmp.ne.s32.totalorder %s129, %s145
      %p147 = scmp.eq.s32.totalorder %s18, 0
      %p148 = por %p146, %p147
      %p149 = scmp.le.s32.totalorder 1, %s12
      %p150 = scmp.lt.s32.totalorder %s12, 3
      %p151 = pnand %p149, %p150
      %p152 = pneg %p151
      // Predicated region
      $region9: #{gcn_forward.1} parent=5 // pred_check
        _
      $region10: #{gcn_forward.1} parent=5 // pred_check_branch
        %154 = sbr.rel (%p151) target = $region12
      $region11: #{gcn_forward.1} parent=5 // pred_region
        %s155 = ssub.s32 %s12, 1
        // Predicated region
        $region13: #{gcn_forward.1} parent=11 // pred_check
          %p156 = pneg %p57
        $region14: #{gcn_forward.1} parent=11 // pred_check_branch
          %158 = sbr.rel (%p156) target = $region16
        $region15: #{gcn_forward.1} parent=11 // pred_region
          %s159 = smul.u32 16, %s23
          %p160 = scmp.lt.s32.totalorder %s159, 15
          %s161 = scalar_select %p160, %s159, 15
          %s162 = smul.addr %s161, 4
          %s163 = scalar_lea.vmem %s0, %s162
          %s164 = smul.u32 16, %s23
        $region16: #{gcn_forward.1} parent=11 // pred_fallthru
          _
        // Predicated region
        $region17: #{gcn_forward.1} parent=11 // pred_check
          %p165 = pneg %p83
        $region18: #{gcn_forward.1} parent=11 // pred_check_branch
          %167 = sbr.rel (%p165) target = $region20
        $region19: #{gcn_forward.1} parent=11 // pred_region
          %s168 = smul.u32 16, %s23
          %p169 = scmp.lt.s32.totalorder %s168, 15
          %s170 = scalar_select %p169, %s168, 15
          %s171 = smul.addr %s170, 8
          %s172 = scalar_lea.vmem %s1, %s171
          %s173 = smul.u32 16, %s23
        $region20: #{gcn_forward.1} parent=11 // pred_fallthru
          _
      $region12: #{gcn_forward.1} parent=5 // pred_fallthru
        _
      %p174 = scmp.lt.s32.totalorder %s12, 2
      // Predicated region
      $region21: #{gcn_forward.1} parent=5 // pred_check
        %p175 = pneg %p174
      $region22: #{gcn_forward.1} parent=5 // pred_check_branch
        %177 = sbr.rel (%p175) target = $region24
      $region23: #{gcn_forward.1} parent=5 // pred_region
        // Predicated region
        $region25: #{gcn_forward.1} parent=23 // pred_check
          %p178 = pneg %p105
        $region26: #{gcn_forward.1} parent=23 // pred_check_branch
          %180 = sbr.rel (%p178) target = $region28
        $region27: #{gcn_forward.1} parent=23 // pred_region
          %s181 = smul.u32 4, %s21
          %p182 = scmp.lt.s32.totalorder %s19, 1
          %s183 = scalar_select %p182, %s19, 1
          %p184 = scmp.lt.s32.totalorder %s181, 3
          %s185 = scalar_select %p184, %s181, 3
          %s186 = smul.addr %s183, 32
          %s187 = sadd.s32 %s185, %s186
          %s188 = smul.addr %s187, 8
          %s189 = scalar_lea.vmem %s2, %s188
          %s190 = smul.u32 4, %s21
        $region28: #{gcn_forward.1} parent=23 // pred_fallthru
          _
      $region24: #{gcn_forward.1} parent=5 // pred_fallthru
        _
      %p191 = scmp.le.s32.totalorder 1, %s12
      %p192 = scmp.lt.s32.totalorder %s12, 3
      %p193 = pnand %p191, %p192
      %p194 = pneg %p193
      // Predicated region
      $region29: #{gcn_forward.1} parent=5 // pred_check
        _
      $region30: #{gcn_forward.1} parent=5 // pred_check_branch
        %196 = sbr.rel (%p193) target = $region32
      $region31: #{gcn_forward.1} parent=5 // pred_region
        %s197 = ssub.s32 %s12, 1
        %s198 = smul.u32 16, %s23
        %p199 = scmp.lt.s32.totalorder %s198, 15
        %s200 = scalar_select %p199, %s198, 15
        %s201 = smul.addr %s200, 4
        %s202 = scalar_lea.vmem %s0, %s201
        %p203 = pneg %p57
        %p204 = pneg %p54
        %s205 = smul.u32 16, %s23
        %p206 = scmp.lt.s32.totalorder %s205, 15
        %s207 = scalar_select %p206, %s205, 15
        %s208 = smul.addr %s207, 8
        %s209 = scalar_lea.vmem %s1, %s208
        %p210 = pneg %p83
        %p211 = pneg %p80
        %s212 = smul.u32 4, %s24
        %p213 = scmp.lt.s32.totalorder %s22, 1
        %s214 = scalar_select %p213, %s22, 1
        %p215 = scmp.lt.s32.totalorder %s212, 3
        %s216 = scalar_select %p215, %s212, 3
        %s217 = smul.addr %s214, 32
        %s218 = sadd.s32 %s216, %s217
        %s219 = smul.addr %s218, 8
        %s220 = scalar_lea.vmem %s2, %s219
        %p221 = pneg %p111
        %p222 = pneg %p108
        %p223 = pneg %p141
        %p224 = pneg %p138
        %s225 = sand.u32 %s128, 1
        %s226 = scalar_lea.sflag [#allocation3], %s225
        %s227 = sand.u32 %s128, 1
        %s228 = smul.addr %s227, 512
        %s229 = scalar_lea.vmem [#allocation2], %s228
        %s230 = smul.u32 16, %s23
        %p231 = scmp.lt.s32.totalorder %s230, 15
        %s232 = scalar_select %p231, %s230, 15
        %s233 = smul.addr %s232, 4
        %s234 = scalar_lea.vmem %s0, %s233
        %s235 = smul.u32 16, %s23
        %s236 = smul.u32 16, %s23
        %p237 = scmp.lt.s32.totalorder %s236, 15
        %s238 = scalar_select %p237, %s236, 15
        %s239 = smul.addr %s238, 8
        %s240 = scalar_lea.vmem %s1, %s239
        %s241 = smul.u32 16, %s23
        %s242 = smul.u32 4, %s24
        %p243 = scmp.lt.s32.totalorder %s22, 1
        %s244 = scalar_select %p243, %s22, 1
        %p245 = scmp.lt.s32.totalorder %s242, 3
        %s246 = scalar_select %p245, %s242, 3
        %s247 = smul.addr %s244, 32
        %s248 = sadd.s32 %s246, %s247
        %s249 = smul.addr %s248, 8
        %s250 = scalar_lea.vmem %s2, %s249
        %s251 = smul.u32 4, %s24
        %s252 = smul.u32 16, %s23
        %s253 = smul.u32 4, %s24
        %v255 = vld [vmem:[%s250] sm:$0xff]
        %v256 = vld [vmem:[%s250 + $0x8] sm:$0xff]
        %v257 = vld [vmem:[%s250 + $0x10] sm:$0xff]
        %v258 = vld [vmem:[%s250 + $0x18] sm:$0xff]
        %v259 = vld [vmem:[%s250 + $0x20] sm:$0xff]
        %v260 = vld [vmem:[%s250 + $0x28] sm:$0xff]
        %v261 = vld [vmem:[%s250 + $0x30] sm:$0xff]
        %v262 = vld [vmem:[%s250 + $0x38] sm:$0xff]
        %v263 = vld [vmem:[%s250 + $0x40] sm:$0xff]
        %v264 = vld [vmem:[%s250 + $0x48] sm:$0xff]
        %v265 = vld [vmem:[%s250 + $0x50] sm:$0xff]
        %v266 = vld [vmem:[%s250 + $0x58] sm:$0xff]
        %v267 = vld [vmem:[%s250 + $0x60] sm:$0xff]
        %v268 = vld [vmem:[%s250 + $0x68] sm:$0xff]
        %v269 = vld [vmem:[%s250 + $0x70] sm:$0xff]
        %v270 = vld [vmem:[%s250 + $0x78] sm:$0xff]
        %v271 = vld [vmem:[%s250 + $0x80] sm:$0xff]
        %v272 = vld [vmem:[%s250 + $0x88] sm:$0xff]
        %v273 = vld [vmem:[%s250 + $0x90] sm:$0xff]
        %v274 = vld [vmem:[%s250 + $0x98] sm:$0xff]
        %v275 = vld [vmem:[%s250 + $0xa0] sm:$0xff]
        %v276 = vld [vmem:[%s250 + $0xa8] sm:$0xff]
        %v277 = vld [vmem:[%s250 + $0xb0] sm:$0xff]
        %v278 = vld [vmem:[%s250 + $0xb8] sm:$0xff]
        %v279 = vld [vmem:[%s250 + $0xc0] sm:$0xff]
        %v280 = vld [vmem:[%s250 + $0xc8] sm:$0xff]
        %v281 = vld [vmem:[%s250 + $0xd0] sm:$0xff]
        %v282 = vld [vmem:[%s250 + $0xd8] sm:$0xff]
        %v283 = vld [vmem:[%s250 + $0xe0] sm:$0xff]
        %v284 = vld [vmem:[%s250 + $0xe8] sm:$0xff]
        %v285 = vld [vmem:[%s250 + $0xf0] sm:$0xff]
        %v286 = vld [vmem:[%s250 + $0xf8] sm:$0xff]
        %v287 = vpack.c.bf16 %v259, %v255
        %v288 = vpack.c.bf16 %v260, %v256
        %v289 = vpack.c.bf16 %v261, %v257
        %v290 = vpack.c.bf16 %v262, %v258
        %v291 = vpack.c.bf16 %v267, %v263
        %v292 = vpack.c.bf16 %v268, %v264
        %v293 = vpack.c.bf16 %v269, %v265
        %v294 = vpack.c.bf16 %v270, %v266
        %v295 = vpack.c.bf16 %v275, %v271
        %v296 = vpack.c.bf16 %v276, %v272
        %v297 = vpack.c.bf16 %v277, %v273
        %v298 = vpack.c.bf16 %v278, %v274
        %v299 = vpack.c.bf16 %v283, %v279
        %v300 = vpack.c.bf16 %v284, %v280
        %v301 = vpack.c.bf16 %v285, %v281
        %v302 = vpack.c.bf16 %v286, %v282
        %v303 = vld [vmem:[%s234] sm:$0xf]
        %v304 = vld [vmem:[%s234 + $0x4] sm:$0xf]
        %v305 = vld [vmem:[%s234 + $0x8] sm:$0xf]
        %v306 = vld [vmem:[%s234 + $0xc] sm:$0xf]
        %v307 = vld [vmem:[%s234 + $0x10] sm:$0xf]
        %v308 = vld [vmem:[%s234 + $0x14] sm:$0xf]
        %v309 = vld [vmem:[%s234 + $0x18] sm:$0xf]
        %v310 = vld [vmem:[%s234 + $0x1c] sm:$0xf]
        %v311 = vld [vmem:[%s234 + $0x20] sm:$0xf]
        %v312 = vld [vmem:[%s234 + $0x24] sm:$0xf]
        %v313 = vld [vmem:[%s234 + $0x28] sm:$0xf]
        %v314 = vld [vmem:[%s234 + $0x2c] sm:$0xf]
        %v315 = vld [vmem:[%s234 + $0x30] sm:$0xf]
        %v316 = vld [vmem:[%s234 + $0x34] sm:$0xf]
        %v317 = vld [vmem:[%s234 + $0x38] sm:$0xf]
        %v318 = vld [vmem:[%s234 + $0x3c] sm:$0xf]
        %v319 = vld [vmem:[%s240] sm:$0xff]
        %v320 = vld [vmem:[%s240 + $0x8] sm:$0xff]
        %v321 = vld [vmem:[%s240 + $0x10] sm:$0xff]
        %v322 = vld [vmem:[%s240 + $0x18] sm:$0xff]
        %v323 = vld [vmem:[%s240 + $0x20] sm:$0xff]
        %v324 = vld [vmem:[%s240 + $0x28] sm:$0xff]
        %v325 = vld [vmem:[%s240 + $0x30] sm:$0xff]
        %v326 = vld [vmem:[%s240 + $0x38] sm:$0xff]
        %v327 = vld [vmem:[%s240 + $0x40] sm:$0xff]
        %v328 = vld [vmem:[%s240 + $0x48] sm:$0xff]
        %v329 = vld [vmem:[%s240 + $0x50] sm:$0xff]
        %v330 = vld [vmem:[%s240 + $0x58] sm:$0xff]
        %v331 = vld [vmem:[%s240 + $0x60] sm:$0xff]
        %v332 = vld [vmem:[%s240 + $0x68] sm:$0xff]
        %v333 = vld [vmem:[%s240 + $0x70] sm:$0xff]
        %v334 = vld [vmem:[%s240 + $0x78] sm:$0xff]
        %336 = vset.pattern.permute.xlu0 0
        %337 = vperm.xlu0 %336, %v319
        %v338 = vpop.permute.xlu0 %337
        %341 = vset.pattern.permute.xlu0 0
        %342 = vperm.xlu0 %341, %v320
        %v343 = vpop.permute.xlu0 %342
        %346 = vset.pattern.permute.xlu0 0
        %347 = vperm.xlu0 %346, %v321
        %v348 = vpop.permute.xlu0 %347
        %351 = vset.pattern.permute.xlu0 0
        %352 = vperm.xlu0 %351, %v322
        %v353 = vpop.permute.xlu0 %352
        %356 = vset.pattern.permute.xlu0 0
        %357 = vperm.xlu0 %356, %v323
        %v358 = vpop.permute.xlu0 %357
        %361 = vset.pattern.permute.xlu0 0
        %362 = vperm.xlu0 %361, %v324
        %v363 = vpop.permute.xlu0 %362
        %366 = vset.pattern.permute.xlu0 0
        %367 = vperm.xlu0 %366, %v325
        %v368 = vpop.permute.xlu0 %367
        %371 = vset.pattern.permute.xlu0 0
        %372 = vperm.xlu0 %371, %v326
        %v373 = vpop.permute.xlu0 %372
        %376 = vset.pattern.permute.xlu0 0
        %377 = vperm.xlu0 %376, %v327
        %v378 = vpop.permute.xlu0 %377
        %381 = vset.pattern.permute.xlu0 0
        %382 = vperm.xlu0 %381, %v328
        %v383 = vpop.permute.xlu0 %382
        %386 = vset.pattern.permute.xlu0 0
        %387 = vperm.xlu0 %386, %v329
        %v388 = vpop.permute.xlu0 %387
        %391 = vset.pattern.permute.xlu0 0
        %392 = vperm.xlu0 %391, %v330
        %v393 = vpop.permute.xlu0 %392
        %396 = vset.pattern.permute.xlu0 0
        %397 = vperm.xlu0 %396, %v331
        %v398 = vpop.permute.xlu0 %397
        %401 = vset.pattern.permute.xlu0 0
        %402 = vperm.xlu0 %401, %v332
        %v403 = vpop.permute.xlu0 %402
        %406 = vset.pattern.permute.xlu0 0
        %407 = vperm.xlu0 %406, %v333
        %v408 = vpop.permute.xlu0 %407
        %411 = vset.pattern.permute.xlu0 0
        %412 = vperm.xlu0 %411, %v334
        %v413 = vpop.permute.xlu0 %412
        %v431 = vunpack.c.l.b16 %v303
        %v432 = vunpack.c.l.b16 %v304
        %v433 = vunpack.c.l.b16 %v305
        %v434 = vunpack.c.l.b16 %v306
        %v435 = vunpack.c.l.b16 %v307
        %v436 = vunpack.c.l.b16 %v308
        %v437 = vunpack.c.l.b16 %v309
        %v438 = vunpack.c.l.b16 %v310
        %v439 = vunpack.c.l.b16 %v311
        %v440 = vunpack.c.l.b16 %v312
        %v441 = vunpack.c.l.b16 %v313
        %v442 = vunpack.c.l.b16 %v314
        %v443 = vunpack.c.l.b16 %v315
        %v444 = vunpack.c.l.b16 %v316
        %v445 = vunpack.c.l.b16 %v317
        %v446 = vunpack.c.l.b16 %v318
        %v447 = vpack.c.b16 %v432, %v431
        %v448 = vpack.c.b16 %v434, %v433
        %v449 = vpack.c.b16 %v436, %v435
        %v450 = vpack.c.b16 %v438, %v437
        %v451 = vpack.c.b16 %v440, %v439
        %v452 = vpack.c.b16 %v442, %v441
        %v453 = vpack.c.b16 %v444, %v443
        %v454 = vpack.c.b16 %v446, %v445
        %vm455 = vcmask 523264
        %v457 = vsel %vm455, %v447, 0
        %v460 = vsel %vm455, %v448, 0
        %v463 = vsel %vm455, %v449, 0
        %v466 = vsel %vm455, %v450, 0
        %v469 = vsel %vm455, %v451, 0
        %v472 = vsel %vm455, %v452, 0
        %v475 = vsel %vm455, %v453, 0
        %v478 = vsel %vm455, %v454, 0
        %480 = vmatpush.bf16.msra.mxu0 0
        %481 = vmatpush.bf16.msra.mxu0 0
        %482 = vmatpush.bf16.msra.mxu0 0
        %483 = vmatpush.bf16.msra.mxu0 0
        %484 = vmatpush.bf16.msra.mxu0 %v299
        %485 = vmatpush.bf16.msra.mxu0 %v295
        %486 = vmatpush.bf16.msra.mxu0 %v291
        %487 = vmatpush.bf16.msra.mxu0 %v287
        %488 = vmatmul.bf16.gmra.mxu0 %v457
        %v489 = vpop.f32.mrf.mxu0
        %v490 = vadd.f32 %v338, %v489
        %v491 = vpop.f32.mrf.mxu0
        %v492 = vadd.f32 %v343, %v491
        %493 = vmatmul.bf16.gmra.mxu0 %v460
        %v494 = vpop.f32.mrf.mxu0
        %v495 = vadd.f32 %v348, %v494
        %v496 = vpop.f32.mrf.mxu0
        %v497 = vadd.f32 %v353, %v496
        %498 = vmatmul.bf16.gmra.mxu0 %v463
        %v499 = vpop.f32.mrf.mxu0
        %v500 = vadd.f32 %v358, %v499
        %v501 = vpop.f32.mrf.mxu0
        %v502 = vadd.f32 %v363, %v501
        %503 = vmatmul.bf16.gmra.mxu0 %v466
        %v504 = vpop.f32.mrf.mxu0
        %v505 = vadd.f32 %v368, %v504
        %v506 = vpop.f32.mrf.mxu0
        %v507 = vadd.f32 %v373, %v506
        %508 = vmatmul.bf16.gmra.mxu0 %v469
        %v509 = vpop.f32.mrf.mxu0
        %v510 = vadd.f32 %v378, %v509
        %v511 = vpop.f32.mrf.mxu0
        %v512 = vadd.f32 %v383, %v511
        %513 = vmatmul.bf16.gmra.mxu0 %v472
        %v514 = vpop.f32.mrf.mxu0
        %v515 = vadd.f32 %v388, %v514
        %v516 = vpop.f32.mrf.mxu0
        %v517 = vadd.f32 %v393, %v516
        %518 = vmatmul.bf16.gmra.mxu0 %v475
        %v519 = vpop.f32.mrf.mxu0
        %v520 = vadd.f32 %v398, %v519
        %v521 = vpop.f32.mrf.mxu0
        %v522 = vadd.f32 %v403, %v521
        %523 = vmatmul.bf16.gmra.mxu0 %v478
        %v524 = vpop.f32.mrf.mxu0
        %v525 = vadd.f32 %v408, %v524
        %v526 = vpop.f32.mrf.mxu0
        %v527 = vadd.f32 %v413, %v526
        %528 = vdwg.mxu0
        %529 = vmatpush.bf16.msra.mxu0 0
        %530 = vmatpush.bf16.msra.mxu0 0
        %531 = vmatpush.bf16.msra.mxu0 0
        %532 = vmatpush.bf16.msra.mxu0 0
        %533 = vmatpush.bf16.msra.mxu0 %v300
        %534 = vmatpush.bf16.msra.mxu0 %v296
        %535 = vmatpush.bf16.msra.mxu0 %v292
        %536 = vmatpush.bf16.msra.mxu0 %v288
        %537 = vmatmul.bf16.gmra.mxu0 %v457
        %v538 = vpop.f32.mrf.mxu0
        %v539 = vadd.f32 %v338, %v538
        %v540 = vpop.f32.mrf.mxu0
        %v541 = vadd.f32 %v343, %v540
        %542 = vmatmul.bf16.gmra.mxu0 %v460
        %v543 = vpop.f32.mrf.mxu0
        %v544 = vadd.f32 %v348, %v543
        %v545 = vpop.f32.mrf.mxu0
        %v546 = vadd.f32 %v353, %v545
        %547 = vmatmul.bf16.gmra.mxu0 %v463
        %v548 = vpop.f32.mrf.mxu0
        %v549 = vadd.f32 %v358, %v548
        %v550 = vpop.f32.mrf.mxu0
        %v551 = vadd.f32 %v363, %v550
        %552 = vmatmul.bf16.gmra.mxu0 %v466
        %v553 = vpop.f32.mrf.mxu0
        %v554 = vadd.f32 %v368, %v553
        %v555 = vpop.f32.mrf.mxu0
        %v556 = vadd.f32 %v373, %v555
        %557 = vmatmul.bf16.gmra.mxu0 %v469
        %v558 = vpop.f32.mrf.mxu0
        %v559 = vadd.f32 %v378, %v558
        %v560 = vpop.f32.mrf.mxu0
        %v561 = vadd.f32 %v383, %v560
        %562 = vmatmul.bf16.gmra.mxu0 %v472
        %v563 = vpop.f32.mrf.mxu0
        %v564 = vadd.f32 %v388, %v563
        %v565 = vpop.f32.mrf.mxu0
        %v566 = vadd.f32 %v393, %v565
        %567 = vmatmul.bf16.gmra.mxu0 %v475
        %v568 = vpop.f32.mrf.mxu0
        %v569 = vadd.f32 %v398, %v568
        %v570 = vpop.f32.mrf.mxu0
        %v571 = vadd.f32 %v403, %v570
        %572 = vmatmul.bf16.gmra.mxu0 %v478
        %v573 = vpop.f32.mrf.mxu0
        %v574 = vadd.f32 %v408, %v573
        %v575 = vpop.f32.mrf.mxu0
        %v576 = vadd.f32 %v413, %v575
        %577 = vdwg.mxu0
        %578 = vmatpush.bf16.msra.mxu0 0
        %579 = vmatpush.bf16.msra.mxu0 0
        %580 = vmatpush.bf16.msra.mxu0 0
        %581 = vmatpush.bf16.msra.mxu0 0
        %582 = vmatpush.bf16.msra.mxu0 %v301
        %583 = vmatpush.bf16.msra.mxu0 %v297
        %584 = vmatpush.bf16.msra.mxu0 %v293
        %585 = vmatpush.bf16.msra.mxu0 %v289
        %586 = vmatmul.bf16.gmra.mxu0 %v457
        %v587 = vpop.f32.mrf.mxu0
        %v588 = vadd.f32 %v338, %v587
        %v589 = vpop.f32.mrf.mxu0
        %v590 = vadd.f32 %v343, %v589
        %591 = vmatmul.bf16.gmra.mxu0 %v460
        %v592 = vpop.f32.mrf.mxu0
        %v593 = vadd.f32 %v348, %v592
        %v594 = vpop.f32.mrf.mxu0
        %v595 = vadd.f32 %v353, %v594
        %596 = vmatmul.bf16.gmra.mxu0 %v463
        %v597 = vpop.f32.mrf.mxu0
        %v598 = vadd.f32 %v358, %v597
        %v599 = vpop.f32.mrf.mxu0
        %v600 = vadd.f32 %v363, %v599
        %601 = vmatmul.bf16.gmra.mxu0 %v466
        %v602 = vpop.f32.mrf.mxu0
        %v603 = vadd.f32 %v368, %v602
        %v604 = vpop.f32.mrf.mxu0
        %v605 = vadd.f32 %v373, %v604
        %606 = vmatmul.bf16.gmra.mxu0 %v469
        %v607 = vpop.f32.mrf.mxu0
        %v608 = vadd.f32 %v378, %v607
        %v609 = vpop.f32.mrf.mxu0
        %v610 = vadd.f32 %v383, %v609
        %611 = vmatmul.bf16.gmra.mxu0 %v472
        %v612 = vpop.f32.mrf.mxu0
        %v613 = vadd.f32 %v388, %v612
        %v614 = vpop.f32.mrf.mxu0
        %v615 = vadd.f32 %v393, %v614
        %616 = vmatmul.bf16.gmra.mxu0 %v475
        %v617 = vpop.f32.mrf.mxu0
        %v618 = vadd.f32 %v398, %v617
        %v619 = vpop.f32.mrf.mxu0
        %v620 = vadd.f32 %v403, %v619
        %621 = vmatmul.bf16.gmra.mxu0 %v478
        %v622 = vpop.f32.mrf.mxu0
        %v623 = vadd.f32 %v408, %v622
        %v624 = vpop.f32.mrf.mxu0
        %v625 = vadd.f32 %v413, %v624
        %626 = vdwg.mxu0
        %627 = vmatpush.bf16.msra.mxu0 0
        %628 = vmatpush.bf16.msra.mxu0 0
        %629 = vmatpush.bf16.msra.mxu0 0
        %630 = vmatpush.bf16.msra.mxu0 0
        %631 = vmatpush.bf16.msra.mxu0 %v302
        %632 = vmatpush.bf16.msra.mxu0 %v298
        %633 = vmatpush.bf16.msra.mxu0 %v294
        %634 = vmatpush.bf16.msra.mxu0 %v290
        %635 = vmatmul.bf16.gmra.mxu0 %v457
        %v636 = vpop.f32.mrf.mxu0
        %v637 = vadd.f32 %v338, %v636
        %v638 = vpop.f32.mrf.mxu0
        %v639 = vadd.f32 %v343, %v638
        %640 = vmatmul.bf16.gmra.mxu0 %v460
        %v641 = vpop.f32.mrf.mxu0
        %v642 = vadd.f32 %v348, %v641
        %v643 = vpop.f32.mrf.mxu0
        %v644 = vadd.f32 %v353, %v643
        %645 = vmatmul.bf16.gmra.mxu0 %v463
        %v646 = vpop.f32.mrf.mxu0
        %v647 = vadd.f32 %v358, %v646
        %v648 = vpop.f32.mrf.mxu0
        %v649 = vadd.f32 %v363, %v648
        %650 = vmatmul.bf16.gmra.mxu0 %v466
        %v651 = vpop.f32.mrf.mxu0
        %v652 = vadd.f32 %v368, %v651
        %v653 = vpop.f32.mrf.mxu0
        %v654 = vadd.f32 %v373, %v653
        %655 = vmatmul.bf16.gmra.mxu0 %v469
        %v656 = vpop.f32.mrf.mxu0
        %v657 = vadd.f32 %v378, %v656
        %v658 = vpop.f32.mrf.mxu0
        %v659 = vadd.f32 %v383, %v658
        %660 = vmatmul.bf16.gmra.mxu0 %v472
        %v661 = vpop.f32.mrf.mxu0
        %v662 = vadd.f32 %v388, %v661
        %v663 = vpop.f32.mrf.mxu0
        %v664 = vadd.f32 %v393, %v663
        %665 = vmatmul.bf16.gmra.mxu0 %v475
        %v666 = vpop.f32.mrf.mxu0
        %v667 = vadd.f32 %v398, %v666
        %v668 = vpop.f32.mrf.mxu0
        %v669 = vadd.f32 %v403, %v668
        %670 = vmatmul.bf16.gmra.mxu0 %v478
        %v671 = vpop.f32.mrf.mxu0
        %v672 = vadd.f32 %v408, %v671
        %v673 = vpop.f32.mrf.mxu0
        %v674 = vadd.f32 %v413, %v673
        %675 = vdwg.mxu0
        %676 = vst [vmem:[%s229] sm:$0xff] %v490
        %677 = vst [vmem:[%s229 + $0x8] sm:$0xff] %v539
        %678 = vst [vmem:[%s229 + $0x10] sm:$0xff] %v588
        %679 = vst [vmem:[%s229 + $0x18] sm:$0xff] %v637
        %680 = vst [vmem:[%s229 + $0x20] sm:$0xff] %v492
        %681 = vst [vmem:[%s229 + $0x28] sm:$0xff] %v541
        %682 = vst [vmem:[%s229 + $0x30] sm:$0xff] %v590
        %683 = vst [vmem:[%s229 + $0x38] sm:$0xff] %v639
        %684 = vst [vmem:[%s229 + $0x40] sm:$0xff] %v495
        %685 = vst [vmem:[%s229 + $0x48] sm:$0xff] %v544
        %686 = vst [vmem:[%s229 + $0x50] sm:$0xff] %v593
        %687 = vst [vmem:[%s229 + $0x58] sm:$0xff] %v642
        %688 = vst [vmem:[%s229 + $0x60] sm:$0xff] %v497
        %689 = vst [vmem:[%s229 + $0x68] sm:$0xff] %v546
        %690 = vst [vmem:[%s229 + $0x70] sm:$0xff] %v595
        %691 = vst [vmem:[%s229 + $0x78] sm:$0xff] %v644
        %692 = vst [vmem:[%s229 + $0x80] sm:$0xff] %v500
        %693 = vst [vmem:[%s229 + $0x88] sm:$0xff] %v549
        %694 = vst [vmem:[%s229 + $0x90] sm:$0xff] %v598
        %695 = vst [vmem:[%s229 + $0x98] sm:$0xff] %v647
        %696 = vst [vmem:[%s229 + $0xa0] sm:$0xff] %v502
        %697 = vst [vmem:[%s229 + $0xa8] sm:$0xff] %v551
        %698 = vst [vmem:[%s229 + $0xb0] sm:$0xff] %v600
        %699 = vst [vmem:[%s229 + $0xb8] sm:$0xff] %v649
        %700 = vst [vmem:[%s229 + $0xc0] sm:$0xff] %v505
        %701 = vst [vmem:[%s229 + $0xc8] sm:$0xff] %v554
        %702 = vst [vmem:[%s229 + $0xd0] sm:$0xff] %v603
        %703 = vst [vmem:[%s229 + $0xd8] sm:$0xff] %v652
        %704 = vst [vmem:[%s229 + $0xe0] sm:$0xff] %v507
        %705 = vst [vmem:[%s229 + $0xe8] sm:$0xff] %v556
        %706 = vst [vmem:[%s229 + $0xf0] sm:$0xff] %v605
        %707 = vst [vmem:[%s229 + $0xf8] sm:$0xff] %v654
        %708 = vst [vmem:[%s229 + $0x100] sm:$0xff] %v510
        %709 = vst [vmem:[%s229 + $0x108] sm:$0xff] %v559
        %710 = vst [vmem:[%s229 + $0x110] sm:$0xff] %v608
        %711 = vst [vmem:[%s229 + $0x118] sm:$0xff] %v657
        %712 = vst [vmem:[%s229 + $0x120] sm:$0xff] %v512
        %713 = vst [vmem:[%s229 + $0x128] sm:$0xff] %v561
        %714 = vst [vmem:[%s229 + $0x130] sm:$0xff] %v610
        %715 = vst [vmem:[%s229 + $0x138] sm:$0xff] %v659
        %716 = vst [vmem:[%s229 + $0x140] sm:$0xff] %v515
        %717 = vst [vmem:[%s229 + $0x148] sm:$0xff] %v564
        %718 = vst [vmem:[%s229 + $0x150] sm:$0xff] %v613
        %719 = vst [vmem:[%s229 + $0x158] sm:$0xff] %v662
        %720 = vst [vmem:[%s229 + $0x160] sm:$0xff] %v517
        %721 = vst [vmem:[%s229 + $0x168] sm:$0xff] %v566
        %722 = vst [vmem:[%s229 + $0x170] sm:$0xff] %v615
        %723 = vst [vmem:[%s229 + $0x178] sm:$0xff] %v664
        %724 = vst [vmem:[%s229 + $0x180] sm:$0xff] %v520
        %725 = vst [vmem:[%s229 + $0x188] sm:$0xff] %v569
        %726 = vst [vmem:[%s229 + $0x190] sm:$0xff] %v618
        %727 = vst [vmem:[%s229 + $0x198] sm:$0xff] %v667
        %728 = vst [vmem:[%s229 + $0x1a0] sm:$0xff] %v522
        %729 = vst [vmem:[%s229 + $0x1a8] sm:$0xff] %v571
        %730 = vst [vmem:[%s229 + $0x1b0] sm:$0xff] %v620
        %731 = vst [vmem:[%s229 + $0x1b8] sm:$0xff] %v669
        %732 = vst [vmem:[%s229 + $0x1c0] sm:$0xff] %v525
        %733 = vst [vmem:[%s229 + $0x1c8] sm:$0xff] %v574
        %734 = vst [vmem:[%s229 + $0x1d0] sm:$0xff] %v623
        %735 = vst [vmem:[%s229 + $0x1d8] sm:$0xff] %v672
        %736 = vst [vmem:[%s229 + $0x1e0] sm:$0xff] %v527
        %737 = vst [vmem:[%s229 + $0x1e8] sm:$0xff] %v576
        %738 = vst [vmem:[%s229 + $0x1f0] sm:$0xff] %v625
        %739 = vst [vmem:[%s229 + $0x1f8] sm:$0xff] %v674
        %s740 = sand.u32 %s128, 1
        %s741 = scalar_lea.sflag [#allocation3], %s740
        %s742 = sand.u32 %s128, 1
        %s743 = smul.addr %s742, 512
        %s744 = scalar_lea.vmem [#allocation2], %s743
        // Predicated region
        $region33: #{gcn_forward.1} parent=31 // pred_check
          %p745 = pneg %p138
        $region34: #{gcn_forward.1} parent=31 // pred_check_branch
          %747 = sbr.rel (%p745) target = $region36
        $region35: #{gcn_forward.1} parent=31 // pred_region
          %s748 = smul.u32 16, %s23
          %s749 = smul.u32 4, %s24
          %751 = vsyncadd %s741, 0
          %s752 = smul.addr %s748, 4
          %s753 = sadd.s32 %s749, %s752
          %s754 = smul.addr %s22, 64
          %s755 = sadd.s32 %s753, %s754
          %s756 = smul.addr %s755, 8
          %s757 = scalar_lea.hbm %s3, %s756
          %s758 = sshll.u32 %s744, 4
          %s759 = int_to_ptr.vmem [resolvable:$true] %s758
          %s760 = sshll.u32 %s757, 4
          %s761 = int_to_ptr.hbm [resolvable:$true] %s760
          %766 = dma.vmem_to_hbm [thread:$0]  %s759, 8192, %s761, %s741, 512, 512, 32
        $region36: #{gcn_forward.1} parent=31 // pred_fallthru
          _
      $region32: #{gcn_forward.1} parent=5 // pred_fallthru
        _
      %p767 = scmp.le.s32.totalorder 2, %s12
      // Predicated region
      $region37: #{gcn_forward.1} parent=5 // pred_check
        %p768 = pneg %p767
      $region38: #{gcn_forward.1} parent=5 // pred_check_branch
        %770 = sbr.rel (%p768) target = $region40
      $region39: #{gcn_forward.1} parent=5 // pred_region
        %s771 = ssub.s32 %s12, 2
        // Predicated region
        $region41: #{gcn_forward.1} parent=39 // pred_check
          %p772 = pneg %p144
        $region42: #{gcn_forward.1} parent=39 // pred_check_branch
          %774 = sbr.rel (%p772) target = $region44
        $region43: #{gcn_forward.1} parent=39 // pred_region
          %s775 = sand.u32 %s129, 1
          %s776 = scalar_lea.sflag [#allocation3], %s775
          %s777 = sand.u32 %s129, 1
          %s778 = smul.addr %s777, 512
          %s779 = scalar_lea.vmem [#allocation2], %s778
          %781 = dma.done %s776, 8192
        $region44: #{gcn_forward.1} parent=39 // pred_fallthru
          _
      $region40: #{gcn_forward.1} parent=5 // pred_fallthru
        _
    $region6: #{gcn_forward.1} parent=1 // loop_footer
      %s16 = sadd.s32 1, %s12
    $region7: #{gcn_forward.1} parent=1 // loop_footer_branch
      %11 = sbr.rel target = $region3
    $region8: #{gcn_forward.1} parent=1 // loop_exit
      _
    %782 = vsyncpa [#allocation3], 1
    %s783 = scalar_lea.sflag [#allocation3], 1
    %784 = vsyncpa %s783, 1

</llo_original>
